<compile_context>
chip_gen: v7x
topology: tpu7x:2x2x1
jax: 0.10.0
libtpu: 0.0.40
codegen_flags: <defaults>
</compile_context>

<pallas_src>
import functools
import math

import jax
import jax.numpy as jnp
from jax.experimental import pallas as pl
from jax.experimental.pallas import tpu as pltpu

_HALF_PI = math.pi / 2.0


# ---------------------------------------------------------------------------
# Reference (PositionalEncoding.compute_positional_encoding equivalent).
# Only used for the correctness check and the tiny-tensor XLA fallback.
# ---------------------------------------------------------------------------
def compute_positional_encoding(embed_dim: int, max_len: int = 10000) -> jnp.ndarray:
    position = jnp.arange(0, max_len, dtype=jnp.float32)[:, None]              # (max_len, 1)
    div_term = jnp.exp(
        jnp.arange(0, embed_dim, 2, dtype=jnp.float32) * (-math.log(10000.0) / embed_dim)
    )                                                                           # (E/2,)
    angles = position * div_term                                                # (max_len, E/2)
    pe = jnp.zeros((max_len, embed_dim), dtype=jnp.float32)
    pe = pe.at[:, 0::2].set(jnp.sin(angles))
    pe = pe.at[:, 1::2].set(jnp.cos(angles))
    return pe[None, :, :]                                                       # (1, max_len, E)


# ---------------------------------------------------------------------------
# Kernels
# ---------------------------------------------------------------------------
def _pe_add_seq_kernel(x_ref, o_ref, *, block_rows, embed_dim, freq_scale):
    """Blocks are (block_rows, embed_dim); rows are sequence positions.
    pe = sin(pos * inv_freq(d) + phase(d)) with inv_freq/phase lane-row consts."""
    s0 = pl.program_id(1) * block_rows
    pos = (s0 + jax.lax.broadcasted_iota(jnp.int32, (block_rows, 1), 0)).astype(jnp.float32)
    d = jax.lax.broadcasted_iota(jnp.int32, (1, embed_dim), 1)                  # (1, E)
    inv_freq = jnp.exp(jnp.bitwise_and(d, -2).astype(jnp.float32) * freq_scale)  # exp(2*(d//2)*s)
    phase = jnp.bitwise_and(d, 1).astype(jnp.float32) * _HALF_PI                 # 0 (even) / pi/2 (odd)
    pe = jnp.sin(pos * inv_freq + phase)                                         # (rows, E)
    o_ref[...] = (x_ref[...].astype(jnp.float32) + pe).astype(o_ref.dtype)


def _pe_add_flat_kernel(x_ref, ab_ref, o_ref, *, block_rows):
    """Lane-dense path: blocks are (block_rows, lane_width) slices of the
    flattened per-batch (seq*embed) axis.  ab_ref is a resident (2, W) f32
    constant slab: row 0 = A = (W/E)*inv_freq, row 1 = C = (ci//E)*inv_freq + phase.
    pe = sin(flat_row * A + C)."""
    r0 = pl.program_id(1) * block_rows
    row = (r0 + jax.lax.broadcasted_iota(jnp.int32, (block_rows, 1), 0)).astype(jnp.float32)
    pe = jnp.sin(row * ab_ref[0:1, :] + ab_ref[1:2, :])                          # (rows, W)
    o_ref[...] = (x_ref[...].astype(jnp.float32) + pe).astype(o_ref.dtype)


# ---------------------------------------------------------------------------
# Tiling helpers
# ---------------------------------------------------------------------------
_PER_BLOCK_BYTE_BUDGET = 6 * 1024 * 1024    # x + out double-buffered -> ~4 live blocks (~24 MiB)
_VMEM_LIMIT_BYTES = 32 * 1024 * 1024        # portable across v5e/v6e (128 MiB) and v7x (64 MiB)


def _sublane_multiple(itemsize: int) -> int:
    return {4: 8, 2: 16, 1: 32}.get(itemsize, 8)


def _pick_block_rows(num_rows: int, row_width: int, itemsize: int) -> int:
    max_rows = max(1, _PER_BLOCK_BYTE_BUDGET // (row_width * itemsize))
    if max_rows >= num_rows:
        return num_rows                      # full extent is always a legal block dim
    sub = _sublane_multiple(itemsize)
    rows = (max_rows // sub) * sub
    return rows if rows > 0 else min(sub, num_rows)


def _even_tile_count(num_rows: int, block_rows: int, itemsize: int, batch: int) -> int:
    """v7x megacore balance: with an odd batch, make the row-tile count even so
    total grid steps split evenly across 2 TensorCores (no effect on v5e/v6e)."""
    if batch % 2 == 0:
        return block_rows
    sub = _sublane_multiple(itemsize)
    n_tiles = -(-num_rows // block_rows)
    if n_tiles % 2 == 0 or num_rows <= sub:
        return block_rows
    target = n_tiles + 1
    cand = -(-num_rows // target)
    cand = -(-cand // sub) * sub             # block_rows must stay a sublane multiple
    if cand >= sub and (-(-num_rows // cand)) % 2 == 0:
        return cand
    return block_rows


def _pick_lane_width(seq_len: int, embed_dim: int, max_width: int = 2048):
    """Largest W (multiple of both 128 and embed_dim) dividing seq_len*embed_dim."""
    base = math.lcm(embed_dim, 128)
    total = seq_len * embed_dim
    if base > max_width or total % base != 0:
        return None
    best = base
    m = 2
    while base * m <= max_width:
        if total % (base * m) == 0:
            best = base * m
        m += 1
    return best


def _flat_pe_constants(lane_width: int, embed_dim: int, freq_scale: float) -> jnp.ndarray:
    """Host-side (2, W) f32 slab: angle(row, ci) = row * A[ci] + C[ci]."""
    ci = jnp.arange(lane_width, dtype=jnp.int32)
    d = ci % embed_dim
    inv_freq = jnp.exp(jnp.bitwise_and(d, -2).astype(jnp.float32) * freq_scale)
    phase = jnp.bitwise_and(d, 1).astype(jnp.float32) * _HALF_PI
    pos_in_row = (ci // embed_dim).astype(jnp.float32)
    a = float(lane_width // embed_dim) * inv_freq
    c = pos_in_row * inv_freq + phase
    return jnp.stack([a, c], axis=0)         # (2, W) f32, < 16 KiB, stays resident


# ---------------------------------------------------------------------------
# Pallas wrapper + dispatcher
# ---------------------------------------------------------------------------
def _positional_encoding_pallas(x: jnp.ndarray, donate: bool = False) -> jnp.ndarray:
    B, S, E = x.shape
    assert E % 2 == 0, "embed_dim must be even (as in the PyTorch module)"
    itemsize = jnp.dtype(x.dtype).itemsize
    freq_scale = -math.log(10000.0) / E
    compiler_params = pltpu.CompilerParams(
        dimension_semantics=("parallel", "parallel"),
        vmem_limit_bytes=_VMEM_LIMIT_BYTES,
    )
    io_alias = {0: 0} if donate else {}

    lane_width = None if E % 128 == 0 else _pick_lane_width(S, E)

    if lane_width is None:
        # (B, S, E) path: lane dense whenever E % 128 == 0; otherwise the
        # full-extent last dim is a correct (masked-store) fallback.
        block_rows = _pick_block_rows(S, E, itemsize)
        block_rows = _even_tile_count(S, block_rows, itemsize, B)
        kernel = functools.partial(_pe_add_seq_kernel, block_rows=block_rows,
                                   embed_dim=E, freq_scale=freq_scale)
        spec = pl.BlockSpec((pl.Squeezed(), block_rows, E), lambda b, r: (b, r, 0))
        return pl.pallas_call(
            kernel,
            out_shape=jax.ShapeDtypeStruct((B, S, E), x.dtype),
            grid_spec=pltpu.PrefetchScalarGridSpec(
                num_scalar_prefetch=0,
                grid=(B, pl.cdiv(S, block_rows)),
                in_specs=[spec],
                out_specs=spec),
            compiler_params=compiler_params,
            input_output_aliases=io_alias,
        )(x)

    # Lane-dense flattened path (any even E with a valid W): view each batch
    # element's (S, E) slab as (rows, W), W a multiple of 128 and of E.
    rows = (S * E) // lane_width
    block_rows = _pick_block_rows(rows, lane_width, itemsize)
    block_rows = _even_tile_count(rows, block_rows, itemsize, B)
    consts = _flat_pe_constants(lane_width, E, freq_scale)
    kernel = functools.partial(_pe_add_flat_kernel, block_rows=block_rows)
    spec = pl.BlockSpec((pl.Squeezed(), block_rows, lane_width), lambda b, r: (b, r, 0))
    const_spec = pl.BlockSpec((2, lane_width), lambda b, r: (0, 0))   # resident
    out_flat = pl.pallas_call(
        kernel,
        out_shape=jax.ShapeDtypeStruct((B, rows, lane_width), x.dtype),
        grid_spec=pltpu.PrefetchScalarGridSpec(
            num_scalar_prefetch=0,
            grid=(B, pl.cdiv(rows, block_rows)),
            in_specs=[spec, const_spec],
            out_specs=spec),
        compiler_params=compiler_params,
        input_output_aliases=io_alias,
    )(x.reshape(B, rows, lane_width), consts)
    return out_flat.reshape(B, S, E)


_MIN_PALLAS_BYTES = 256 * 1024


def positional_encoding_forward(x: jnp.ndarray, *, max_len: int = 10000,
                                force_pallas: bool = False,
                                donate: bool = False) -> jnp.ndarray:
    """forward(x): x + pe[:, :seq_len, :] with pe broadcast over batch."""
    B, S, E = x.shape
    assert S <= max_len, "sequence length exceeds max_len"
    if not force_pallas and x.size * jnp.dtype(x.dtype).itemsize < _MIN_PALLAS_BYTES:
        # Tiny tensors: one fused XLA add beats per-kernel launch/grid overhead.
        pe = compute_positional_encoding(E, S)                  # (1, S, E) f32
        return (x.astype(jnp.float32) + pe).astype(x.dtype)
    return _positional_encoding_pallas(x, donate=donate)


# ---------------------------------------------------------------------------
# Demo / correctness check
# ---------------------------------------------------------------------------
if __name__ == "__main__":
    key = jax.random.PRNGKey(0)
    configs = [
        (2, 8, 32),     # module's implied small shape; lane-dense flat path (W=256)
        (2, 16, 128),   # embed_dim % 128 == 0; (B, S, E) path
        (1, 24, 96),    # non-power-of-two E; generalized lane-dense flat path (W=1152)
        (1, 64, 128),   # odd batch: row tiles split evenly for v7x megacore balance
        (2, 5, 48),     # no valid lane width -> masked-store (full-extent) fallback
    ]
    for (B, S, E) in configs:
        key, sub = jax.random.split(key)
        x = jax.random.normal(sub, (B, S, E), dtype=jnp.float32)

        out = jax.block_until_ready(positional_encoding_forward(x, force_pallas=True))

        pe = compute_positional_encoding(E, max(64, S))            # module __init__ equivalent
        ref = (x.astype(jnp.float32) + pe[:, :S, :]).astype(x.dtype)
        assert out.shape == (B, S, E)
        assert jnp.allclose(out, ref, atol=1e-4, rtol=1e-4), f"mismatch vs reference for {(B, S, E)}"

        # Donated-input path (input_output_aliases={0: 0}); the copy is not used afterwards.
        x_copy = x + 0.0
        out_d = jax.block_until_ready(
            positional_encoding_forward(x_copy, force_pallas=True, donate=True))
        assert jnp.allclose(out_d, ref, atol=1e-4, rtol=1e-4), f"donate mismatch for {(B, S, E)}"

        # Size-based dispatcher (XLA fallback for tiny inputs).
        out2 = jax.block_until_ready(positional_encoding_forward(x))
        assert jnp.allclose(out2, ref, atol=1e-4, rtol=1e-4)

    print("KERNEL_OK")
</pallas_src>

<mosaic_0001>
module attributes {stable_mosaic.version = 11 : i64} {
  func.func @_pe_add_flat_kernel(%arg0: i32, %arg1: i32, %arg2: memref<1x1x256xf32, #tpu.memory_space<vmem>>, %arg3: memref<2x256xf32, #tpu.memory_space<vmem>>, %arg4: memref<1x1x256xf32, #tpu.memory_space<vmem>>) attributes {dimension_semantics = [#tpu.dimension_semantics<parallel>, #tpu.dimension_semantics<parallel>], iteration_bounds = array<i64: 2, 1>, scalar_prefetch = 0 : i64, scratch_operands = 0 : i64, tpu.core_type = #tpu.core_type<tc>, window_params = [{transform_indices = @transform_0, window_bounds = array<i64: 1, 1, 256>}, {pipeline_mode = #tpu.pipeline_mode<synchronous>, transform_indices = @transform_1, window_bounds = array<i64: 2, 256>}, {transform_indices = @transform_2, window_bounds = array<i64: 1, 1, 256>}]} {
    %c1_i32 = arith.constant 1 : i32
    %0 = arith.muli %arg1, %c1_i32 : i32
    %1 = tpu.iota {dimensions = array<i32: 0>} : vector<1x1xi32>
    %2 = vector.broadcast %0 : i32 to vector<1x1xi32>
    %3 = arith.addi %2, %1 : vector<1x1xi32>
    %4 = arith.sitofp %3 : vector<1x1xi32> to vector<1x1xf32>
    %c0 = arith.constant 0 : index
    %c0_0 = arith.constant 0 : index
    %5 = vector.load %arg3[%c0, %c0_0] : memref<2x256xf32, #tpu.memory_space<vmem>>, vector<1x256xf32>
    %6 = vector.broadcast %4 : vector<1x1xf32> to vector<1x256xf32>
    %7 = arith.mulf %6, %5 : vector<1x256xf32>
    %c1 = arith.constant 1 : index
    %c0_1 = arith.constant 0 : index
    %8 = vector.load %arg3[%c1, %c0_1] : memref<2x256xf32, #tpu.memory_space<vmem>>, vector<1x256xf32>
    %9 = arith.addf %7, %8 : vector<1x256xf32>
    %10 = math.sin %9 : vector<1x256xf32>
    %c0_2 = arith.constant 0 : index
    %c0_3 = arith.constant 0 : index
    %c0_4 = arith.constant 0 : index
    %11 = vector.load %arg2[%c0_2, %c0_3, %c0_4] : memref<1x1x256xf32, #tpu.memory_space<vmem>>, vector<1x1x256xf32>
    %12 = vector.shape_cast %11 : vector<1x1x256xf32> to vector<1x256xf32>
    %13 = arith.addf %12, %10 : vector<1x256xf32>
    %c0_5 = arith.constant 0 : index
    %c0_6 = arith.constant 0 : index
    %c0_7 = arith.constant 0 : index
    %14 = vector.load %arg4[%c0_5, %c0_6, %c0_7] : memref<1x1x256xf32, #tpu.memory_space<vmem>>, vector<1x1x256xf32>
    %15 = vector.shape_cast %14 : vector<1x1x256xf32> to vector<1x256xf32>
    %16 = vector.shape_cast %13 : vector<1x256xf32> to vector<1x1x256xf32>
    tpu.vector_store %arg4[%c0_5, %c0_6, %c0_7], %16 {strides = array<i32>} : memref<1x1x256xf32, #tpu.memory_space<vmem>>, vector<1x1x256xf32>,
    return
  }
  func.func @transform_0(%arg0: i32, %arg1: i32) -> (i32, i32, i32) {
    %c0_i32 = arith.constant 0 : i32
    %c0_i32_0 = arith.constant 0 : i32
    return %arg0, %arg1, %c0_i32 : i32, i32, i32
  }
  func.func @transform_1(%arg0: i32, %arg1: i32) -> (i32, i32) {
    %c0_i32 = arith.constant 0 : i32
    %c0_i32_0 = arith.constant 0 : i32
    %c0_i32_1 = arith.constant 0 : i32
    return %c0_i32, %c0_i32_0 : i32, i32
  }
  func.func @transform_2(%arg0: i32, %arg1: i32) -> (i32, i32, i32) {
    %c0_i32 = arith.constant 0 : i32
    %c0_i32_0 = arith.constant 0 : i32
    return %arg0, %arg1, %c0_i32 : i32, i32, i32
  }
}

</mosaic_0001>

<llo_original>
// kernel: tpu_custom_call.1
$region0: #{tpu_custom_call.1}
  #allocation0 [shape = 'u32[]', space=smem, size = 0x4, offset = 0x4, fixed_abs, tag = 'smem constant byte address 0x4 - core index']
  #allocation1 [shape = 'u32[144,128]{1,0:T(1,128)}', space=vmem, size = 0x12000, scoped, tag = 'internal scratch']
  %s0 = inlined_call_operand.hbm [shape: f32[2,1,256], index: 0, kind: input, shape index: {}]
  %s1 = inlined_call_operand.hbm [shape: f32[2,256], index: 1, kind: input, shape index: {}]
  %s2 = inlined_call_operand.hbm [shape: f32[2,1,256], index: 2, kind: output, shape index: {}]
  %s3 = sld [smem:[#allocation0]]
  $region49: #{tpu_custom_call.1} parent=0
    _
  %s5 = ssub.s32 1, %s3
  %s6 = scalar_select 0, %s5, %s3
  $region1: #{tpu_custom_call.1} parent=0
    #allocation2 [shape = 'u8[2048]{0}', space=vmem, size = 0x800, scoped, tag = 'input window, operand 0']
    #allocation3 [shape = 's32[2]{0}', space=sflag, size = 0x8, scoped, tag = 'scoped memory for tpu_custom_call.1']
    #allocation4 [shape = 's32[2]{0}', space=sflag, size = 0x8, scoped, tag = 'scoped memory for tpu_custom_call.1']
    #allocation5 [shape = 'u8[2048]{0}', space=vmem, size = 0x800, scoped, tag = 'input window, operand 1, single buffered']
    #allocation6 [shape = 's32[1]{0}', space=sflag, size = 0x4, scoped, tag = 'scoped memory for tpu_custom_call.1']
    #allocation7 [shape = 'u8[2048]{0}', space=vmem, size = 0x800, scoped, tag = 'output window, operand 0']
    %7 = vsyncpa [#allocation3], 0
    %s8 = scalar_lea.sflag [#allocation3], 1
    %9 = vsyncpa %s8, 0
    %10 = vsyncpa [#allocation6], 0
    %11 = vsyncpa [#allocation4], 0
    %s12 = scalar_lea.sflag [#allocation4], 1
    %13 = vsyncpa %s12, 0
    loop: start=0, step=1, limit=4
    $region2: #{tpu_custom_call.1} parent=1 // loop_pre_header
      _
    $region3: #{tpu_custom_call.1} parent=1 // loop_header
      %s15 = sphi 0, %s19
      %p16 = scmp.ge.s32.totalorder %s15, 4
      %s22 = sphi 0, %s34
      %s23 = sphi 0, %s30
      %s24 = sphi 0, %s22
      %s25 = sphi 0, %s23
      %s26 = sphi 0, %s24
      %s27 = sphi 0, %s25
      %s39 = sphi 0, %s41
      %s42 = sphi 0, %s39
      %s43 = sphi 0, %s42
      %s59 = sphi 0, %s43
      %s63 = sphi 0, %s63
      %s65 = sphi 0, %s63
      %s66 = sphi 0, %s65
      %s80 = sphi 0, %s66
      %s88 = sphi 0, %s90
      %s91 = sphi 0, %s88
      %s92 = sphi 0, %s91
      %s108 = sphi 0, %s92
    $region4: #{tpu_custom_call.1} parent=1 // loop_header_branch
      %18 = sbr.rel (%p16) target = $region8
    $region5: #{tpu_custom_call.1} parent=1 // loop_body
      %s20 = ssub.s32 %s15, 1
      %s21 = ssub.s32 %s15, 2
      %s28 = sadd.s32 1, %s23
      %p29 = scmp.ge.s32.totalorder %s28, 1
      %s30 = scalar_select %p29, 0, %s28
      %s31 = sadd.s32 1, %s22
      %s32 = scalar_select %p29, %s31, %s22
      %p33 = scmp.ge.s32.totalorder %s32, 2
      %s34 = scalar_select %p33, 0, %s32
      %s35 = ssub.s32 %s22, %s34
      %s36 = ssub.s32 %s23, %s30
      %s37 = sor.u32 %s35, %s36
      %p38 = scmp.eq.s32.totalorder %s37, 0
      %s40 = sadd.s32 %s39, 1
      %s41 = scalar_select %p38, %s39, %s40
      %p44 = pneg %p38
      %p45 = scmp.eq.s32.totalorder %s15, 1
      %p46 = por %p44, %p45
      %p47 = scmp.ne.s32.totalorder %s39, %s42
      %p48 = scmp.eq.s32.totalorder %s15, 0
      %p49 = por %p47, %p48
      %p50 = scmp.ne.s32.totalorder %s39, %s42
      %p51 = scmp.eq.s32.totalorder %s20, 1
      %p52 = por %p50, %p51
      %p53 = scmp.ne.s32.totalorder %s42, %s43
      %p54 = scmp.eq.s32.totalorder %s20, 0
      %p55 = por %p53, %p54
      %p56 = scmp.ne.s32.totalorder %s42, %s43
      %p57 = scmp.eq.s32.totalorder %s21, 1
      %p58 = por %p56, %p57
      %p60 = scmp.ne.s32.totalorder %s43, %s59
      %p61 = scmp.eq.s32.totalorder %s21, 0
      %p62 = por %p60, %p61
      %s64 = sadd.s32 %s63, 1
      %p67 = scmp.eq.s32.totalorder %s15, 1
      %p68 = scmp.ne.s32.totalorder %s63, %s65
      %p69 = scmp.eq.s32.totalorder %s15, 0
      %p70 = por %p68, %p69
      %p71 = scmp.ne.s32.totalorder %s63, %s65
      %p72 = scmp.eq.s32.totalorder %s20, 1
      %p73 = por %p71, %p72
      %p74 = scmp.ne.s32.totalorder %s65, %s66
      %p75 = scmp.eq.s32.totalorder %s20, 0
      %p76 = por %p74, %p75
      %p77 = scmp.ne.s32.totalorder %s65, %s66
      %p78 = scmp.eq.s32.totalorder %s21, 1
      %p79 = por %p77, %p78
      %p81 = scmp.ne.s32.totalorder %s66, %s80
      %p82 = scmp.eq.s32.totalorder %s21, 0
      %p83 = por %p81, %p82
      %s84 = ssub.s32 %s22, %s34
      %s85 = ssub.s32 %s23, %s30
      %s86 = sor.u32 %s84, %s85
      %p87 = scmp.eq.s32.totalorder %s86, 0
      %s89 = sadd.s32 %s88, 1
      %s90 = scalar_select %p87, %s88, %s89
      %p93 = pneg %p87
      %p94 = scmp.eq.s32.totalorder %s15, 1
      %p95 = por %p93, %p94
      %p96 = scmp.ne.s32.totalorder %s88, %s91
      %p97 = scmp.eq.s32.totalorder %s15, 0
      %p98 = por %p96, %p97
      %p99 = scmp.ne.s32.totalorder %s88, %s91
      %p100 = scmp.eq.s32.totalorder %s20, 1
      %p101 = por %p99, %p100
      %p102 = scmp.ne.s32.totalorder %s91, %s92
      %p103 = scmp.eq.s32.totalorder %s20, 0
      %p104 = por %p102, %p103
      %p105 = scmp.ne.s32.totalorder %s91, %s92
      %p106 = scmp.eq.s32.totalorder %s21, 1
      %p107 = por %p105, %p106
      %p109 = scmp.ne.s32.totalorder %s92, %s108
      %p110 = scmp.eq.s32.totalorder %s21, 0
      %p111 = por %p109, %p110
      %p112 = scmp.le.s32.totalorder 1, %s15
      %p113 = scmp.lt.s32.totalorder %s15, 3
      %p114 = pnand %p112, %p113
      %p115 = pneg %p114
      // Predicated region
      $region9: #{tpu_custom_call.1} parent=5 // pred_check
        _
      $region10: #{tpu_custom_call.1} parent=5 // pred_check_branch
        %117 = sbr.rel (%p114) target = $region12
      $region11: #{tpu_custom_call.1} parent=5 // pred_region
        %s118 = ssub.s32 %s15, 1
        // Predicated region
        $region13: #{tpu_custom_call.1} parent=11 // pred_check
          %p119 = pneg %p76
        $region14: #{tpu_custom_call.1} parent=11 // pred_check_branch
          %121 = sbr.rel (%p119) target = $region16
        $region15: #{tpu_custom_call.1} parent=11 // pred_region
          %s123 = ssub.s32 64, 64
          %124 = vsyncadd [#allocation6], %s123
          %s126 = sshll.u32 [#allocation5], 4
          %s127 = int_to_ptr.vmem [resolvable:$true] %s126
          %129 = dma.hbm_to_vmem [thread:$0]  %s1, 64, %s127, [#allocation6]
        $region16: #{tpu_custom_call.1} parent=11 // pred_fallthru
          _
      $region12: #{tpu_custom_call.1} parent=5 // pred_fallthru
        _
      %p130 = scmp.lt.s32.totalorder %s15, 2
      // Predicated region
      $region17: #{tpu_custom_call.1} parent=5 // pred_check
        %p131 = pneg %p130
      $region18: #{tpu_custom_call.1} parent=5 // pred_check_branch
        %133 = sbr.rel (%p131) target = $region20
      $region19: #{tpu_custom_call.1} parent=5 // pred_region
        // Predicated region
        $region21: #{tpu_custom_call.1} parent=19 // pred_check
          %p134 = pneg %p49
        $region22: #{tpu_custom_call.1} parent=19 // pred_check_branch
          %136 = sbr.rel (%p134) target = $region24
        $region23: #{tpu_custom_call.1} parent=19 // pred_region
          %s137 = sand.u32 %s39, 1
          %s138 = scalar_lea.sflag [#allocation3], %s137
          %s139 = sand.u32 %s39, 1
          %s140 = smul.addr %s139, 2
          %s141 = scalar_lea.vmem [#allocation2], %s140
          %s143 = ssub.s32 32, 32
          %144 = vsyncadd %s138, %s143
          %s145 = smul.addr %s23, 2
          %s146 = smul.addr %s22, 2
          %s147 = sadd.s32 %s145, %s146
          %s148 = smul.addr %s147, 16
          %s149 = scalar_lea.hbm %s0, %s148
          %s151 = sshll.u32 %s141, 4
          %s152 = int_to_ptr.vmem [resolvable:$true] %s151
          %154 = dma.hbm_to_vmem [thread:$0]  %s149, 32, %s152, %s138
        $region24: #{tpu_custom_call.1} parent=19 // pred_fallthru
          _
      $region20: #{tpu_custom_call.1} parent=5 // pred_fallthru
        _
      %p155 = scmp.le.s32.totalorder 1, %s15
      %p156 = scmp.lt.s32.totalorder %s15, 3
      %p157 = pnand %p155, %p156
      %p158 = pneg %p157
      // Predicated region
      $region25: #{tpu_custom_call.1} parent=5 // pred_check
        _
      $region26: #{tpu_custom_call.1} parent=5 // pred_check_branch
        %160 = sbr.rel (%p157) target = $region28
      $region27: #{tpu_custom_call.1} parent=5 // pred_region
        %s161 = ssub.s32 %s15, 1
        %s162 = sand.u32 %s42, 1
        %s163 = scalar_lea.sflag [#allocation3], %s162
        %s164 = sand.u32 %s42, 1
        %s165 = smul.addr %s164, 2
        %s166 = scalar_lea.vmem [#allocation2], %s165
        // Predicated region
        $region29: #{tpu_custom_call.1} parent=27 // pred_check
          %p167 = pneg %p55
        $region30: #{tpu_custom_call.1} parent=27 // pred_check_branch
          %169 = sbr.rel (%p167) target = $region32
        $region31: #{tpu_custom_call.1} parent=27 // pred_region
          %170 = dma.done %s163, 32
        $region32: #{tpu_custom_call.1} parent=27 // pred_fallthru
          _
        // Predicated region
        $region33: #{tpu_custom_call.1} parent=27 // pred_check
          %p171 = pneg %p76
        $region34: #{tpu_custom_call.1} parent=27 // pred_check_branch
          %173 = sbr.rel (%p171) target = $region36
        $region35: #{tpu_custom_call.1} parent=27 // pred_region
          %174 = dma.done [#allocation6], 64
        $region36: #{tpu_custom_call.1} parent=27 // pred_fallthru
          _
        %s175 = sand.u32 %s42, 1
        %s176 = scalar_lea.sflag [#allocation3], %s175
        %s177 = sand.u32 %s42, 1
        %s178 = smul.addr %s177, 2
        %s179 = scalar_lea.vmem [#allocation2], %s178
        %p180 = pneg %p55
        %p181 = pneg %p52
        %p182 = pneg %p76
        %p183 = pneg %p73
        %p184 = pneg %p104
        %p185 = pneg %p101
        %s186 = sand.u32 %s91, 1
        %s187 = scalar_lea.sflag [#allocation4], %s186
        %s188 = sand.u32 %s91, 1
        %s189 = smul.addr %s188, 2
        %s190 = scalar_lea.vmem [#allocation7], %s189
        %v191 = vlaneseq
        %v192 = vshrl.u32 %v191, 7
        %v193 = vstv %s25
        %v194 = vadd.s32 %v193, %v192
        %v195 = vcvt.s32.f32 %v194
        %v196 = vld [vmem:[#allocation5] ss:$2 sm:$0x3]
        %v198 = vlaneseq
        %v199 = vshrl.u32 %v198, 7
        %v200 = vsub.s32 0, %v199
        %v201 = vrot.slane %v196, %v200
        %v202 = vlaneseq
        %v203 = vshrl.u32 %v202, 7
        %v204 = vsub.s32 1, %v203
        %v205 = vrot.slane %v196, %v204
        %v208 = vmul.f32 %v195, %v201
        %v209 = vmul.f32 %v195, %v205
        %s210 = scalar_lea.vmem [#allocation5], 1
        %v211 = vld [vmem:[%s210] ss:$2 sm:$0x3]
        %v213 = vlaneseq
        %v214 = vshrl.u32 %v213, 7
        %v215 = vsub.s32 0, %v214
        %v216 = vrot.slane %v211, %v215
        %v217 = vlaneseq
        %v218 = vshrl.u32 %v217, 7
        %v219 = vsub.s32 1, %v218
        %v220 = vrot.slane %v211, %v219
        %v223 = vadd.f32 %v208, %v216
        %v224 = vadd.f32 %v209, %v220
        %v225 = vand.u32 2147483647, %v223
        %vm226 = vcmp.le.f32.partialorder %v225, 0.7853982
        %vm227 = vcmp.lt.s32.totalorder %v223, 0
        %v228 = vand.u32 %v223, 2139095040
        %v229 = vshrl.u32 %v228, 23
        %v230 = vsub.s32 %v229, 127
        %v231 = vand.u32 2147483647, %v223
        %v232 = vand.u32 %v231, 8388607
        %v233 = vor.u32 %v232, 8388608
        %v234 = vsub.s32 0, %v233
        %v235 = vadd.s32 %v230, 1
        %vm236 = vcmp.gt.s32.totalorder %v235, 0
        %v237 = vsel %vm236, %v235, 0
        %v238 = vshrl.u32 %v237, 5
        %v239 = vand.u32 %v237, 31
        %v240 = vsub.s32 32, %v239
        %v241 = vshrl.u32 683565275, %v240
        %v242 = vshll.u32 683565275, %v239
        %v243 = vshrl.u32 2475754826, %v240
        %v244 = vor.u32 %v242, %v243
        %v245 = vshll.u32 2475754826, %v239
        %v246 = vshrl.u32 2131351028, %v240
        %v247 = vor.u32 %v245, %v246
        %v248 = vshll.u32 2131351028, %v239
        %v249 = vshrl.u32 2102212464, %v240
        %v250 = vor.u32 %v248, %v249
        %v251 = vshll.u32 2102212464, %v239
        %v252 = vshrl.u32 920167782, %v240
        %v253 = vor.u32 %v251, %v252
        %v254 = vshll.u32 920167782, %v239
        %v255 = vshrl.u32 1326507024, %v240
        %v256 = vor.u32 %v254, %v255
        %vm257 = vcmp.lt.s32.totalorder %v238, 1
        %vm258 = vcmp.lt.s32.totalorder %v238, 2
        %vm259 = vcmp.lt.s32.totalorder %v238, 3
        %vm260 = vcmp.lt.s32.totalorder %v238, 4
        %v261 = vsel %vm257, %v241, %v244
        %v262 = vsel %vm260, %v250, 2102212464
        %v263 = vsel %vm259, %v247, %v262
        %v264 = vsel %vm258, %v261, %v263
        %v265 = vsel %vm257, %v244, %v247
        %v266 = vsel %vm260, %v253, 920167782
        %v267 = vsel %vm259, %v250, %v266
        %v268 = vsel %vm258, %v265, %v267
        %v269 = vsel %vm257, %v247, %v250
        %v270 = vsel %vm260, %v256, 1326507024
        %v271 = vsel %vm259, %v253, %v270
        %v272 = vsel %vm258, %v269, %v271
        %v273 = vshll.u32 %v233, 8
        %v274 = vmul.u32.u64.compose %v273, %v272
        %v275 = vextract.low.u32 %v274
        %v276 = vextract.high.u32 %v274
        %v277 = vmul.u32.u64.compose %v273, %v268
        %v278 = vextract.low.u32 %v277
        %v279 = vextract.high.u32 %v277
        %v280 = vmul.u32 %v273, %v264
        %v281 = vadd.s32 %v276, %v278
        %vm282 = vc.u32 %v276, %v278
        %v283 = vadd.s32 %v279, 1
        %v284 = vsel %vm282, %v283, %v279
        %v285 = vadd.s32 %v280, %v284
        %v286 = vadd.s32 %v285, 536870912
        %v287 = vshrl.u32 %v286, 30
        %v288 = vshll.u32 %v287, 30
        %v289 = vsub.s32 %v285, %v288
        %vm290 = vcmp.lt.s32.totalorder %v289, 0
        %v291 = vsub.s32 0, %v289
        %v292 = vsel %vm290, %v291, %v289
        %v293 = vclz %v292
        %v294 = vsub.s32 %v293, 2
        %vm295 = vcmp.gt.s32.totalorder 0, %v294
        %v296 = vsel %vm295, 0, %v294
        %v297 = vsub.s32 32, %v296
        %v298 = vshll.u32 %v289, %v296
        %v299 = vshrl.u32 %v281, %v297
        %v300 = vor.u32 %v298, %v299
        %v301 = vsub.s32 4294967266, %v296
        %v302 = vadd.s32 %v301, 127
        %v303 = vshll.u32 %v302, 23
        %v304 = vor.u32 4788187, %v303
        %v305 = vand.u32 2147483647, %v304
        %v307 = vcvt.s32.f32 %v300
        %v308 = vmul.f32 %v307, %v305
        %v309 = vxor.u32 %v308, 2147483648
        %v310 = vsel %vm227, %v309, %v308
        %v311 = vsub.s32 4, %v287
        %v312 = vsel %vm227, %v311, %v287
        %v313 = vsel %vm226, %v223, %v310
        %v314 = vsel %vm226, 0, %v312
        %v315 = vcosq.f32.pop %v313
        %v316 = vsinq.f32.pop %v313
        %vm317 = vweird.f32 %v223
        %v318 = vadd.s32 %v314, 3
        %v319 = vand.u32 %v318, 3
        %vm320 = vcmp.lt.s32.totalorder %v319, 2
        %vm321 = vcmp.eq.s32.totalorder %v319, 0
        %v322 = vxor.u32 %v316, 2147483648
        %v323 = vsel %vm321, %v315, %v322
        %vm324 = vcmp.eq.s32.totalorder %v319, 2
        %v325 = vxor.u32 %v315, 2147483648
        %v326 = vsel %vm324, %v325, %v316
        %v327 = vsel %vm320, %v323, %v326
        %v328 = vsel %vm317, nan, %v327
        %v329 = vand.u32 2147483647, %v224
        %vm330 = vcmp.le.f32.partialorder %v329, 0.7853982
        %vm331 = vcmp.lt.s32.totalorder %v224, 0
        %v332 = vand.u32 %v224, 2139095040
        %v333 = vshrl.u32 %v332, 23
        %v334 = vsub.s32 %v333, 127
        %v335 = vand.u32 2147483647, %v224
        %v336 = vand.u32 %v335, 8388607
        %v337 = vor.u32 %v336, 8388608
        %v338 = vsub.s32 0, %v337
        %v339 = vadd.s32 %v334, 1
        %vm340 = vcmp.gt.s32.totalorder %v339, 0
        %v341 = vsel %vm340, %v339, 0
        %v342 = vshrl.u32 %v341, 5
        %v343 = vand.u32 %v341, 31
        %v344 = vsub.s32 32, %v343
        %v345 = vshrl.u32 683565275, %v344
        %v346 = vshll.u32 683565275, %v343
        %v347 = vshrl.u32 2475754826, %v344
        %v348 = vor.u32 %v346, %v347
        %v349 = vshll.u32 2475754826, %v343
        %v350 = vshrl.u32 2131351028, %v344
        %v351 = vor.u32 %v349, %v350
        %v352 = vshll.u32 2131351028, %v343
        %v353 = vshrl.u32 2102212464, %v344
        %v354 = vor.u32 %v352, %v353
        %v355 = vshll.u32 2102212464, %v343
        %v356 = vshrl.u32 920167782, %v344
        %v357 = vor.u32 %v355, %v356
        %v358 = vshll.u32 920167782, %v343
        %v359 = vshrl.u32 1326507024, %v344
        %v360 = vor.u32 %v358, %v359
        %vm361 = vcmp.lt.s32.totalorder %v342, 1
        %vm362 = vcmp.lt.s32.totalorder %v342, 2
        %vm363 = vcmp.lt.s32.totalorder %v342, 3
        %vm364 = vcmp.lt.s32.totalorder %v342, 4
        %v365 = vsel %vm361, %v345, %v348
        %v366 = vsel %vm364, %v354, 2102212464
        %v367 = vsel %vm363, %v351, %v366
        %v368 = vsel %vm362, %v365, %v367
        %v369 = vsel %vm361, %v348, %v351
        %v370 = vsel %vm364, %v357, 920167782
        %v371 = vsel %vm363, %v354, %v370
        %v372 = vsel %vm362, %v369, %v371
        %v373 = vsel %vm361, %v351, %v354
        %v374 = vsel %vm364, %v360, 1326507024
        %v375 = vsel %vm363, %v357, %v374
        %v376 = vsel %vm362, %v373, %v375
        %v377 = vshll.u32 %v337, 8
        %v378 = vmul.u32.u64.compose %v377, %v376
        %v379 = vextract.low.u32 %v378
        %v380 = vextract.high.u32 %v378
        %v381 = vmul.u32.u64.compose %v377, %v372
        %v382 = vextract.low.u32 %v381
        %v383 = vextract.high.u32 %v381
        %v384 = vmul.u32 %v377, %v368
        %v385 = vadd.s32 %v380, %v382
        %vm386 = vc.u32 %v380, %v382
        %v387 = vadd.s32 %v383, 1
        %v388 = vsel %vm386, %v387, %v383
        %v389 = vadd.s32 %v384, %v388
        %v390 = vadd.s32 %v389, 536870912
        %v391 = vshrl.u32 %v390, 30
        %v392 = vshll.u32 %v391, 30
        %v393 = vsub.s32 %v389, %v392
        %vm394 = vcmp.lt.s32.totalorder %v393, 0
        %v395 = vsub.s32 0, %v393
        %v396 = vsel %vm394, %v395, %v393
        %v397 = vclz %v396
        %v398 = vsub.s32 %v397, 2
        %vm399 = vcmp.gt.s32.totalorder 0, %v398
        %v400 = vsel %vm399, 0, %v398
        %v401 = vsub.s32 32, %v400
        %v402 = vshll.u32 %v393, %v400
        %v403 = vshrl.u32 %v385, %v401
        %v404 = vor.u32 %v402, %v403
        %v405 = vsub.s32 4294967266, %v400
        %v406 = vadd.s32 %v405, 127
        %v407 = vshll.u32 %v406, 23
        %v408 = vor.u32 4788187, %v407
        %v409 = vand.u32 2147483647, %v408
        %v411 = vcvt.s32.f32 %v404
        %v412 = vmul.f32 %v411, %v409
        %v413 = vxor.u32 %v412, 2147483648
        %v414 = vsel %vm331, %v413, %v412
        %v415 = vsub.s32 4, %v391
        %v416 = vsel %vm331, %v415, %v391
        %v417 = vsel %vm330, %v224, %v414
        %v418 = vsel %vm330, 0, %v416
        %v419 = vcosq.f32.pop %v417
        %v420 = vsinq.f32.pop %v417
        %vm421 = vweird.f32 %v224
        %v422 = vadd.s32 %v418, 3
        %v423 = vand.u32 %v422, 3
        %vm424 = vcmp.lt.s32.totalorder %v423, 2
        %vm425 = vcmp.eq.s32.totalorder %v423, 0
        %v426 = vxor.u32 %v420, 2147483648
        %v427 = vsel %vm425, %v419, %v426
        %vm428 = vcmp.eq.s32.totalorder %v423, 2
        %v429 = vxor.u32 %v419, 2147483648
        %v430 = vsel %vm428, %v429, %v420
        %v431 = vsel %vm424, %v427, %v430
        %v432 = vsel %vm421, nan, %v431
        %v433 = vld [vmem:[%s166] sm:$0x3]
        %v436 = vcombine.low %v328, %v432
        %v438 = vunpack.c.l.s4 1966171168
        %v439 = vunpack.c.0.s8 %v438
        %v440 = vlaneseq
        %v441 = vshrl.u32 %v440, 7
        %v442 = vsub.s32 %v439, %v441
        %v443 = vrot.slane %v436, %v442
        %v445 = vunpack.c.l.s4 1966171168
        %v446 = vunpack.c.0.s8 %v445
        %v447 = vlaneseq
        %v448 = vshrl.u32 %v447, 7
        %v449 = vsub.s32 %v446, %v448
        %v450 = vrot.slane %v443, %v449
        %v452 = vadd.f32 %v433, %v450
        %v453 = vlaneseq
        %vm454 = vcmp.ge.s32.totalorder %v453, 0
        %vm455 = vcmp.lt.s32.totalorder %v453, 256
        %vm456 = vmand %vm454, %vm455
        %457 = vst.msk [vmem:[%s190] sm:$0x3] %vm456, %v452
        %s458 = sand.u32 %s91, 1
        %s459 = scalar_lea.sflag [#allocation4], %s458
        %s460 = sand.u32 %s91, 1
        %s461 = smul.addr %s460, 2
        %s462 = scalar_lea.vmem [#allocation7], %s461
        // Predicated region
        $region37: #{tpu_custom_call.1} parent=27 // pred_check
          %p463 = pneg %p101
        $region38: #{tpu_custom_call.1} parent=27 // pred_check_branch
          %465 = sbr.rel (%p463) target = $region40
        $region39: #{tpu_custom_call.1} parent=27 // pred_region
          %s467 = ssub.s32 32, 32
          %468 = vsyncadd %s459, %s467
          %s469 = smul.addr %s25, 2
          %s470 = smul.addr %s24, 2
          %s471 = sadd.s32 %s469, %s470
          %s472 = smul.addr %s471, 16
          %s473 = scalar_lea.hbm %s2, %s472
          %s475 = sshll.u32 %s462, 4
          %s476 = int_to_ptr.vmem [resolvable:$true] %s475
          %478 = dma.vmem_to_hbm [thread:$0]  %s476, 32, %s473, %s459
        $region40: #{tpu_custom_call.1} parent=27 // pred_fallthru
          _
      $region28: #{tpu_custom_call.1} parent=5 // pred_fallthru
        _
      %p479 = scmp.le.s32.totalorder 2, %s15
      // Predicated region
      $region41: #{tpu_custom_call.1} parent=5 // pred_check
        %p480 = pneg %p479
      $region42: #{tpu_custom_call.1} parent=5 // pred_check_branch
        %482 = sbr.rel (%p480) target = $region44
      $region43: #{tpu_custom_call.1} parent=5 // pred_region
        %s483 = ssub.s32 %s15, 2
        // Predicated region
        $region45: #{tpu_custom_call.1} parent=43 // pred_check
          %p484 = pneg %p107
        $region46: #{tpu_custom_call.1} parent=43 // pred_check_branch
          %486 = sbr.rel (%p484) target = $region48
        $region47: #{tpu_custom_call.1} parent=43 // pred_region
          %s487 = sand.u32 %s92, 1
          %s488 = scalar_lea.sflag [#allocation4], %s487
          %s489 = sand.u32 %s92, 1
          %s490 = smul.addr %s489, 2
          %s491 = scalar_lea.vmem [#allocation7], %s490
          %492 = dma.done %s488, 32
        $region48: #{tpu_custom_call.1} parent=43 // pred_fallthru
          _
      $region44: #{tpu_custom_call.1} parent=5 // pred_fallthru
        _
    $region6: #{tpu_custom_call.1} parent=1 // loop_footer
      %s19 = sadd.s32 1, %s15
    $region7: #{tpu_custom_call.1} parent=1 // loop_footer_branch
      %14 = sbr.rel target = $region3
    $region8: #{tpu_custom_call.1} parent=1 // loop_exit
      _
    %493 = vsyncpa [#allocation3], 1
    %s494 = scalar_lea.sflag [#allocation3], 1
    %495 = vsyncpa %s494, 1
    %496 = vsyncpa [#allocation6], 1
    %497 = vsyncpa [#allocation4], 1
    %s498 = scalar_lea.sflag [#allocation4], 1
    %499 = vsyncpa %s498, 1

</llo_original>
